<compile_context>
chip_gen: v7x
topology: tpu7x:2x2x1
jax: 0.10.0
libtpu: 0.0.40
codegen_flags: <defaults>
</compile_context>

<pallas_src>
import functools

import jax
import jax.numpy as jnp
from jax.experimental import pallas as pl
from jax.experimental.pallas import tpu as pltpu


HEAD_PAD = 8  # slim fused-head width: [advantage | value | zero pad] lanes


def _round_up(x, m):
    return ((x + m - 1) // m) * m


def net_kernel(x_ref, w1_ref, b1_ref, w2_ref, b2_ref, wh_ref, bh_ref,
               q_ref, advsum_ref, *, n_rows, action_dim, tile_n,
               compute_dtype):
    cd = compute_dtype
    x = x_ref[...].astype(cd)

    # fc1 + ReLU (MXU inputs in compute_dtype, f32 accumulate, f32 bias/ReLU)
    h1 = jnp.dot(x, w1_ref[...], preferred_element_type=jnp.float32) + b1_ref[...]
    h1 = jnp.maximum(h1, 0.0)

    # fc2 + ReLU
    h2 = jnp.dot(h1.astype(cd), w2_ref[...],
                 preferred_element_type=jnp.float32) + b2_ref[...]
    h2 = jnp.maximum(h2, 0.0)

    # fused slim head: lanes [0, action_dim) = advantage, lane action_dim =
    # value, remaining lanes are exact zeros (zero-padded weights/bias).
    head = jnp.dot(h2.astype(cd), wh_ref[...],
                   preferred_element_type=jnp.float32) + bh_ref[...]

    lane = jax.lax.broadcasted_iota(jnp.int32, head.shape, 1)
    is_adv = lane < action_dim
    val = head[:, action_dim:action_dim + 1]          # (tile_n, 1) value head

    # slim (tile_n, 8) f32 store of (value + advantage); pad lanes -> 0.
    # Rows beyond n_rows (partial edge tile) are dropped by Pallas writeback.
    q_ref[...] = jnp.where(is_adv, head + val, 0.0).astype(q_ref.dtype)

    # per-tile partial column sums of the advantage only; mask rows beyond the
    # real batch (partial edge tile) so they don't pollute the global mean.
    row = (jax.lax.broadcasted_iota(jnp.int32, head.shape, 0)
           + pl.program_id(0) * tile_n)
    adv_only = jnp.where(is_adv & (row < n_rows), head, 0.0)
    advsum_ref[...] = jnp.sum(adv_only, axis=0, keepdims=True)[None]


@functools.partial(jax.jit, static_argnames=("block_n", "compute_dtype"))
def net_forward(x, params, *, block_n=2048, compute_dtype=jnp.bfloat16):
    n, state_dim = x.shape
    hidden = params["w1"].shape[1]
    head_pad = params["w_head"].shape[1]              # 8-lane slim fused head
    action_dim = params["wa"].shape[1]
    cd = compute_dtype

    # Cast matmul weights ONCE here (resident in compute_dtype inside VMEM;
    # removes per-grid-step VPU casts and halves weight DMA). Biases stay f32.
    w1 = params["w1"].astype(cd)
    w2 = params["w2"].astype(cd)
    wh = params["w_head"].astype(cd)
    b1, b2, bh = params["b1"], params["b2"], params["b_head"]

    # tile_n: multiple of 8, capped at block_n (default 2048 rows to amortize
    # the ~600-cycle per-step pipeline overhead) and at ~ceil(n/2) so the
    # parallel batch axis keeps >= 2 grid steps for the v7x megacore.
    # Per-step VMEM stays tiny (x 64 KB + q 64 KB + ~2 MB f32 intermediates).
    tile_n = min(block_n, _round_up(max(pl.cdiv(n, 2), 1), 8))
    grid_n = pl.cdiv(n, tile_n)

    kernel = functools.partial(
        net_kernel, n_rows=n, action_dim=action_dim, tile_n=tile_n,
        compute_dtype=cd)

    q_padded, adv_colsum = pl.pallas_call(
        kernel,
        grid=(grid_n,),
        in_specs=[
            pl.BlockSpec((tile_n, state_dim), lambda i: (i, 0)),   # x (tiled)
            # constant index_maps -> weights fetched once and kept resident
            pl.BlockSpec((state_dim, hidden), lambda i: (0, 0)),   # w1
            pl.BlockSpec((1, hidden), lambda i: (0, 0)),           # b1 (f32)
            pl.BlockSpec((hidden, hidden), lambda i: (0, 0)),      # w2
            pl.BlockSpec((1, hidden), lambda i: (0, 0)),           # b2 (f32)
            pl.BlockSpec((hidden, head_pad), lambda i: (0, 0)),    # fused head W
            pl.BlockSpec((1, head_pad), lambda i: (0, 0)),         # fused head b
        ],
        out_specs=[
            pl.BlockSpec((tile_n, head_pad), lambda i: (i, 0)),    # slim val+adv
            pl.BlockSpec((1, 1, head_pad), lambda i: (i, 0, 0)),   # adv part-sums
        ],
        out_shape=[
            jax.ShapeDtypeStruct((n, head_pad), jnp.float32),
            jax.ShapeDtypeStruct((grid_n, 1, head_pad), jnp.float32),
        ],
        compiler_params=pltpu.CompilerParams(
            dimension_semantics=("parallel",)),
    )(x, w1, b1, w2, b2, wh, bh)

    # torch `advantage.mean()` = global mean over all N*action_dim elements,
    # applied as a scalar shift; fuses with the (N,8)->(N,action_dim) slice
    # under jit into one trivial pass over the slim output.
    adv_mean = jnp.sum(adv_colsum) / (n * action_dim)
    return q_padded[:, :action_dim] - adv_mean


def init_params(key, state_dim=8, action_dim=4, hidden_dim=128,
                head_pad=HEAD_PAD):
    ks = jax.random.split(key, 8)

    def lin(kw, kb, fan_in, fan_out):
        # same scale rule as torch.nn.Linear default init
        bound = 1.0 / float(fan_in) ** 0.5
        w = jax.random.uniform(kw, (fan_in, fan_out), jnp.float32, -bound, bound)
        b = jax.random.uniform(kb, (1, fan_out), jnp.float32, -bound, bound)
        return w, b

    w1, b1 = lin(ks[0], ks[1], state_dim, hidden_dim)
    w2, b2 = lin(ks[2], ks[3], hidden_dim, hidden_dim)
    wa, ba = lin(ks[4], ks[5], hidden_dim, action_dim)
    wv, bv = lin(ks[6], ks[7], hidden_dim, 1)

    # fused, zero-padded slim head: [advantage | value | zeros] along lanes
    w_head = jnp.zeros((hidden_dim, head_pad), jnp.float32)
    w_head = w_head.at[:, :action_dim].set(wa)
    w_head = w_head.at[:, action_dim:action_dim + 1].set(wv)
    b_head = jnp.zeros((1, head_pad), jnp.float32)
    b_head = b_head.at[:, :action_dim].set(ba)
    b_head = b_head.at[:, action_dim:action_dim + 1].set(bv)

    return dict(w1=w1, b1=b1, w2=w2, b2=b2, w_head=w_head, b_head=b_head,
                wa=wa, ba=ba, wv=wv, bv=bv)


def reference_forward(x, p):
    h1 = jnp.maximum(x @ p["w1"] + p["b1"], 0.0)
    h2 = jnp.maximum(h1 @ p["w2"] + p["b2"], 0.0)
    adv = h2 @ p["wa"] + p["ba"]
    val = h2 @ p["wv"] + p["bv"]
    return val + (adv - jnp.mean(adv))


if __name__ == "__main__":
    key = jax.random.PRNGKey(0)
    k_param, k_small, k_big, k_huge = jax.random.split(key, 4)

    state_dim, action_dim, hidden_dim = 8, 4, 128
    params = init_params(k_param, state_dim, action_dim, hidden_dim)

    # tiny batch (matches the module's toy usage): exact f32 path + bf16 path
    x_small = jax.random.normal(k_small, (2, state_dim), jnp.float32)
    ref_small = reference_forward(x_small, params)
    q_small_f32 = jax.block_until_ready(
        net_forward(x_small, params, compute_dtype=jnp.float32))
    assert q_small_f32.shape == (2, action_dim)
    assert jnp.allclose(q_small_f32, ref_small, atol=1e-4, rtol=1e-4)
    q_small_bf16 = jax.block_until_ready(net_forward(x_small, params))
    assert jnp.allclose(q_small_bf16, ref_small, atol=2e-1, rtol=2e-1)

    # ragged batch: exercises the >=2-tile parallel grid, the partial edge
    # tile, and the tiled global-mean reduction path
    x_big = jax.random.normal(k_big, (300, state_dim), jnp.float32)
    ref_big = reference_forward(x_big, params)
    q_big_f32 = jax.block_until_ready(
        net_forward(x_big, params, compute_dtype=jnp.float32))
    assert q_big_f32.shape == (300, action_dim)
    assert jnp.allclose(q_big_f32, ref_big, atol=1e-4, rtol=1e-4)
    q_big_bf16 = jax.block_until_ready(net_forward(x_big, params))
    assert q_big_bf16.shape == (300, action_dim)
    assert jnp.allclose(q_big_bf16, ref_big, atol=2e-1, rtol=2e-1)

    # larger batch: exercises the 2048-row tile cap (2 full tiles + 1 partial)
    x_huge = jax.random.normal(k_huge, (4500, state_dim), jnp.float32)
    ref_huge = reference_forward(x_huge, params)
    q_huge_f32 = jax.block_until_ready(
        net_forward(x_huge, params, compute_dtype=jnp.float32))
    assert q_huge_f32.shape == (4500, action_dim)
    assert jnp.allclose(q_huge_f32, ref_huge, atol=1e-4, rtol=1e-4)

    print("KERNEL_OK")
</pallas_src>

<mosaic_0001>
module attributes {stable_mosaic.version = 11 : i64} {
  func.func @net_kernel(%arg0: i32, %arg1: memref<8x8xf32, #tpu.memory_space<vmem>>, %arg2: memref<8x128xf32, #tpu.memory_space<vmem>>, %arg3: memref<1x128xf32, #tpu.memory_space<vmem>>, %arg4: memref<128x128xf32, #tpu.memory_space<vmem>>, %arg5: memref<1x128xf32, #tpu.memory_space<vmem>>, %arg6: memref<128x8xf32, #tpu.memory_space<vmem>>, %arg7: memref<1x8xf32, #tpu.memory_space<vmem>>, %arg8: memref<8x8xf32, #tpu.memory_space<vmem>>, %arg9: memref<1x1x8xf32, #tpu.memory_space<vmem>>) attributes {dimension_semantics = [#tpu.dimension_semantics<parallel>], iteration_bounds = array<i64: 1>, scalar_prefetch = 0 : i64, scratch_operands = 0 : i64, tpu.core_type = #tpu.core_type<tc>, window_params = [{transform_indices = @transform_0, window_bounds = array<i64: 8, 8>}, {pipeline_mode = #tpu.pipeline_mode<synchronous>, transform_indices = @transform_1, window_bounds = array<i64: 8, 128>}, {pipeline_mode = #tpu.pipeline_mode<synchronous>, transform_indices = @transform_2, window_bounds = array<i64: 1, 128>}, {pipeline_mode = #tpu.pipeline_mode<synchronous>, transform_indices = @transform_3, window_bounds = array<i64: 128, 128>}, {pipeline_mode = #tpu.pipeline_mode<synchronous>, transform_indices = @transform_4, window_bounds = array<i64: 1, 128>}, {pipeline_mode = #tpu.pipeline_mode<synchronous>, transform_indices = @transform_5, window_bounds = array<i64: 128, 8>}, {pipeline_mode = #tpu.pipeline_mode<synchronous>, transform_indices = @transform_6, window_bounds = array<i64: 1, 8>}, {transform_indices = @transform_7, window_bounds = array<i64: 8, 8>}, {transform_indices = @transform_8, window_bounds = array<i64: 1, 1, 8>}]} {
    %c0 = arith.constant 0 : index
    %c0_0 = arith.constant 0 : index
    %0 = vector.load %arg1[%c0, %c0_0] : memref<8x8xf32, #tpu.memory_space<vmem>>, vector<8x8xf32>
    %c0_1 = arith.constant 0 : index
    %c0_2 = arith.constant 0 : index
    %1 = vector.load %arg2[%c0_1, %c0_2] : memref<8x128xf32, #tpu.memory_space<vmem>>, vector<8x128xf32>
    %cst = arith.constant dense<0.000000e+00> : vector<8x128xf32>
    %2 = tpu.matmul %0, %1, %cst {dimension_numbers = #tpu.dot_dimension_numbers<[1], [0], [0], [1], [0, 0, 1, 1], [], []>} : vector<8x8xf32>, vector<8x128xf32>, vector<8x128xf32> -> vector<8x128xf32>
    %c0_3 = arith.constant 0 : index
    %c0_4 = arith.constant 0 : index
    %3 = vector.load %arg3[%c0_3, %c0_4] : memref<1x128xf32, #tpu.memory_space<vmem>>, vector<1x128xf32>
    %4 = vector.broadcast %3 : vector<1x128xf32> to vector<8x128xf32>
    %5 = arith.addf %2, %4 : vector<8x128xf32>
    %cst_5 = arith.constant 0.000000e+00 : f32
    %6 = vector.broadcast %cst_5 : f32 to vector<8x128xf32>
    %7 = arith.maximumf %5, %6 : vector<8x128xf32>
    %c0_6 = arith.constant 0 : index
    %c0_7 = arith.constant 0 : index
    %8 = vector.load %arg4[%c0_6, %c0_7] : memref<128x128xf32, #tpu.memory_space<vmem>>, vector<128x128xf32>
    %cst_8 = arith.constant dense<0.000000e+00> : vector<8x128xf32>
    %9 = tpu.matmul %7, %8, %cst_8 {dimension_numbers = #tpu.dot_dimension_numbers<[1], [0], [0], [1], [0, 0, 1, 1], [], []>} : vector<8x128xf32>, vector<128x128xf32>, vector<8x128xf32> -> vector<8x128xf32>
    %c0_9 = arith.constant 0 : index
    %c0_10 = arith.constant 0 : index
    %10 = vector.load %arg5[%c0_9, %c0_10] : memref<1x128xf32, #tpu.memory_space<vmem>>, vector<1x128xf32>
    %11 = vector.broadcast %10 : vector<1x128xf32> to vector<8x128xf32>
    %12 = arith.addf %9, %11 : vector<8x128xf32>
    %cst_11 = arith.constant 0.000000e+00 : f32
    %13 = vector.broadcast %cst_11 : f32 to vector<8x128xf32>
    %14 = arith.maximumf %12, %13 : vector<8x128xf32>
    %c0_12 = arith.constant 0 : index
    %c0_13 = arith.constant 0 : index
    %15 = vector.load %arg6[%c0_12, %c0_13] : memref<128x8xf32, #tpu.memory_space<vmem>>, vector<128x8xf32>
    %cst_14 = arith.constant dense<0.000000e+00> : vector<8x8xf32>
    %16 = tpu.matmul %14, %15, %cst_14 {dimension_numbers = #tpu.dot_dimension_numbers<[1], [0], [0], [1], [0, 0, 1, 1], [], []>} : vector<8x128xf32>, vector<128x8xf32>, vector<8x8xf32> -> vector<8x8xf32>
    %c0_15 = arith.constant 0 : index
    %c0_16 = arith.constant 0 : index
    %17 = vector.load %arg7[%c0_15, %c0_16] : memref<1x8xf32, #tpu.memory_space<vmem>>, vector<1x8xf32>
    %18 = vector.broadcast %17 : vector<1x8xf32> to vector<8x8xf32>
    %19 = arith.addf %16, %18 : vector<8x8xf32>
    %20 = tpu.iota {dimensions = array<i32: 1>} : vector<8x8xi32>
    %c4_i32 = arith.constant 4 : i32
    %21 = vector.broadcast %c4_i32 : i32 to vector<8x8xi32>
    %22 = arith.cmpi slt, %20, %21 : vector<8x8xi32>
    %23 = vector.extract_strided_slice %19 {offsets = [0, 4], sizes = [8, 1], strides = [1, 1]} : vector<8x8xf32> to vector<8x1xf32>
    %24 = vector.broadcast %23 : vector<8x1xf32> to vector<8x8xf32>
    %25 = arith.addf %19, %24 : vector<8x8xf32>
    %cst_17 = arith.constant 0.000000e+00 : f32
    %26 = vector.broadcast %cst_17 : f32 to vector<8x8xf32>
    %27 = arith.select %22, %25, %26 : vector<8x8xi1>, vector<8x8xf32>
    %c0_18 = arith.constant 0 : index
    %c0_19 = arith.constant 0 : index
    %28 = vector.load %arg8[%c0_18, %c0_19] : memref<8x8xf32, #tpu.memory_space<vmem>>, vector<8x8xf32>
    tpu.vector_store %arg8[%c0_18, %c0_19], %27 {strides = array<i32>} : memref<8x8xf32, #tpu.memory_space<vmem>>, vector<8x8xf32>,
    %29 = tpu.iota {dimensions = array<i32: 0>} : vector<8x8xi32>
    %c8_i32 = arith.constant 8 : i32
    %30 = arith.muli %arg0, %c8_i32 : i32
    %31 = vector.broadcast %30 : i32 to vector<8x8xi32>
    %32 = arith.addi %29, %31 : vector<8x8xi32>
    %c2_i32 = arith.constant 2 : i32
    %33 = vector.broadcast %c2_i32 : i32 to vector<8x8xi32>
    %34 = arith.cmpi slt, %32, %33 : vector<8x8xi32>
    %35 = arith.andi %22, %34 : vector<8x8xi1>
    %cst_20 = arith.constant 0.000000e+00 : f32
    %36 = vector.broadcast %cst_20 : f32 to vector<8x8xf32>
    %37 = arith.select %35, %19, %36 : vector<8x8xi1>, vector<8x8xf32>
    %cst_21 = arith.constant dense<0.000000e+00> : vector<8xf32>
    %38 = vector.multi_reduction <add>, %37, %cst_21 [0] : vector<8x8xf32> to vector<8xf32>
    %39 = vector.shape_cast %38 : vector<8xf32> to vector<1x8xf32>
    %40 = vector.shape_cast %39 : vector<1x8xf32> to vector<1x1x8xf32>
    %c0_22 = arith.constant 0 : index
    %c0_23 = arith.constant 0 : index
    %c0_24 = arith.constant 0 : index
    %41 = vector.load %arg9[%c0_22, %c0_23, %c0_24] : memref<1x1x8xf32, #tpu.memory_space<vmem>>, vector<1x1x8xf32>
    tpu.vector_store %arg9[%c0_22, %c0_23, %c0_24], %40 {strides = array<i32>} : memref<1x1x8xf32, #tpu.memory_space<vmem>>, vector<1x1x8xf32>,
    return
  }
  func.func @transform_0(%arg0: i32) -> (i32, i32) {
    %c0_i32 = arith.constant 0 : i32
    %c0_i32_0 = arith.constant 0 : i32
    return %arg0, %c0_i32 : i32, i32
  }
  func.func @transform_1(%arg0: i32) -> (i32, i32) {
    %c0_i32 = arith.constant 0 : i32
    %c0_i32_0 = arith.constant 0 : i32
    %c0_i32_1 = arith.constant 0 : i32
    return %c0_i32, %c0_i32_0 : i32, i32
  }
  func.func @transform_2(%arg0: i32) -> (i32, i32) {
    %c0_i32 = arith.constant 0 : i32
    %c0_i32_0 = arith.constant 0 : i32
    %c0_i32_1 = arith.constant 0 : i32
    return %c0_i32, %c0_i32_0 : i32, i32
  }
  func.func @transform_3(%arg0: i32) -> (i32, i32) {
    %c0_i32 = arith.constant 0 : i32
    %c0_i32_0 = arith.constant 0 : i32
    %c0_i32_1 = arith.constant 0 : i32
    return %c0_i32, %c0_i32_0 : i32, i32
  }
  func.func @transform_4(%arg0: i32) -> (i32, i32) {
    %c0_i32 = arith.constant 0 : i32
    %c0_i32_0 = arith.constant 0 : i32
    %c0_i32_1 = arith.constant 0 : i32
    return %c0_i32, %c0_i32_0 : i32, i32
  }
  func.func @transform_5(%arg0: i32) -> (i32, i32) {
    %c0_i32 = arith.constant 0 : i32
    %c0_i32_0 = arith.constant 0 : i32
    %c0_i32_1 = arith.constant 0 : i32
    return %c0_i32, %c0_i32_0 : i32, i32
  }
  func.func @transform_6(%arg0: i32) -> (i32, i32) {
    %c0_i32 = arith.constant 0 : i32
    %c0_i32_0 = arith.constant 0 : i32
    %c0_i32_1 = arith.constant 0 : i32
    return %c0_i32, %c0_i32_0 : i32, i32
  }
  func.func @transform_7(%arg0: i32) -> (i32, i32) {
    %c0_i32 = arith.constant 0 : i32
    %c0_i32_0 = arith.constant 0 : i32
    return %arg0, %c0_i32 : i32, i32
  }
  func.func @transform_8(%arg0: i32) -> (i32, i32, i32) {
    %c0_i32 = arith.constant 0 : i32
    %c0_i32_0 = arith.constant 0 : i32
    %c0_i32_1 = arith.constant 0 : i32
    return %arg0, %c0_i32, %c0_i32_0 : i32, i32, i32
  }
}

</mosaic_0001>

<llo_original>
// kernel: net_forward.1
$region0: #{net_forward.1}
  #allocation0 [shape = 'u32[]', space=smem, size = 0x4, offset = 0x4, fixed_abs, tag = 'smem constant byte address 0x4 - core index']
  #allocation1 [shape = 'u32[144,128]{1,0:T(1,128)}', space=vmem, size = 0x12000, scoped, tag = 'internal scratch']
  %s0 = inlined_call_operand.vmem [shape: f32[2,8], index: 0, kind: input, shape index: {}]
  %s1 = inlined_call_operand.vmem [shape: f32[8,128], index: 1, kind: input, shape index: {}]
  %s2 = inlined_call_operand.vmem [shape: f32[1,128], index: 2, kind: input, shape index: {}]
  %s3 = inlined_call_operand.vmem [shape: f32[128,128], index: 3, kind: input, shape index: {}]
  %s4 = inlined_call_operand.vmem [shape: f32[1,128], index: 4, kind: input, shape index: {}]
  %s5 = inlined_call_operand.vmem [shape: f32[128,8], index: 5, kind: input, shape index: {}]
  %s6 = inlined_call_operand.vmem [shape: f32[1,8], index: 6, kind: input, shape index: {}]
  %s7 = inlined_call_operand.vmem [shape: f32[2,8], index: 7, kind: output, shape index: {0}]
  %s8 = inlined_call_operand.vmem [shape: f32[1,1,8], index: 8, kind: output, shape index: {1}]
  %9 = xla_tuple %s7, %s8
  %s10 = sld [smem:[#allocation0]]
  $region76: #{net_forward.1} parent=0
    _
  %s12 = ssub.s32 1, %s10
  %s13 = scalar_select 0, %s12, %s10
  $region1: #{net_forward.1} parent=0
    #allocation2 [shape = 'u8[4096]{0}', space=vmem, size = 0x1000, scoped, tag = 'output window, operand 0, single buffered']
    // Predicated region
    $region2: #{net_forward.1} parent=1 // pred_check
      _
    $region3: #{net_forward.1} parent=1 // pred_check_branch
      %15 = sbr.rel (0) target = $region5
    $region4: #{net_forward.1} parent=1 // pred_region
      _
    $region5: #{net_forward.1} parent=1 // pred_fallthru
      _
    // Predicated region
    $region6: #{net_forward.1} parent=1 // pred_check
      _
    $region7: #{net_forward.1} parent=1 // pred_check_branch
      %17 = sbr.rel (0) target = $region9
    $region8: #{net_forward.1} parent=1 // pred_region
      _
    $region9: #{net_forward.1} parent=1 // pred_fallthru
      _
    // Predicated region
    $region10: #{net_forward.1} parent=1 // pred_check
      _
    $region11: #{net_forward.1} parent=1 // pred_check_branch
      %19 = sbr.rel (0) target = $region13
    $region12: #{net_forward.1} parent=1 // pred_region
      _
    $region13: #{net_forward.1} parent=1 // pred_fallthru
      _
    // Predicated region
    $region14: #{net_forward.1} parent=1 // pred_check
      _
    $region15: #{net_forward.1} parent=1 // pred_check_branch
      %21 = sbr.rel (0) target = $region17
    $region16: #{net_forward.1} parent=1 // pred_region
      _
    $region17: #{net_forward.1} parent=1 // pred_fallthru
      _
    // Predicated region
    $region18: #{net_forward.1} parent=1 // pred_check
      _
    $region19: #{net_forward.1} parent=1 // pred_check_branch
      %23 = sbr.rel (0) target = $region21
    $region20: #{net_forward.1} parent=1 // pred_region
      _
    $region21: #{net_forward.1} parent=1 // pred_fallthru
      _
    // Predicated region
    $region22: #{net_forward.1} parent=1 // pred_check
      _
    $region23: #{net_forward.1} parent=1 // pred_check_branch
      %25 = sbr.rel (0) target = $region25
    $region24: #{net_forward.1} parent=1 // pred_region
      _
    $region25: #{net_forward.1} parent=1 // pred_fallthru
      _
    // Predicated region
    $region26: #{net_forward.1} parent=1 // pred_check
      _
    $region27: #{net_forward.1} parent=1 // pred_check_branch
      %27 = sbr.rel (0) target = $region29
    $region28: #{net_forward.1} parent=1 // pred_region
      _
    $region29: #{net_forward.1} parent=1 // pred_fallthru
      _
    %v28 = vld [vmem:[%s0] sm:$0xff]
    %v29 = vld [vmem:[%s1] sm:$0xff]
    %v30 = vld [vmem:[%s2] sm:$0x1]
    %v32 = vlaneseq
    %v33 = vshrl.u32 %v32, 7
    %v34 = vsub.s32 0, %v33
    %v35 = vrot.slane %v30, %v34
    %vm37 = vcmask 64512
    %v39 = vsel %vm37, %v28, 0
    %41 = vmatprep.subr.mxu0 0.0
    %42 = vmatpush1.msra.mxu0 %v29
    %43 = vmatprep.subr.mxu0 0.0
    %44 = vmatpush1.msra.mxu0 0.0
    %45 = vmatprep.subr.mxu0 0.0
    %46 = vmatpush1.msra.mxu0 0.0
    %47 = vmatprep.subr.mxu0 0.0
    %48 = vmatpush1.msra.mxu0 0.0
    %49 = vmatprep.subr.mxu0 0.0
    %50 = vmatpush1.msra.mxu0 0.0
    %51 = vmatprep.subr.mxu0 0.0
    %52 = vmatpush1.msra.mxu0 0.0
    %53 = vmatprep.subr.mxu0 0.0
    %54 = vmatpush1.msra.mxu0 0.0
    %55 = vmatprep.subr.mxu0 0.0
    %56 = vmatpush1.msra.mxu0 0.0
    %57 = vmatprep.subr.mxu0 0.0
    %58 = vmatpush1.msra.mxu0 0.0
    %59 = vmatprep.subr.mxu0 0.0
    %60 = vmatpush1.msra.mxu0 0.0
    %61 = vmatprep.subr.mxu0 0.0
    %62 = vmatpush1.msra.mxu0 0.0
    %63 = vmatprep.subr.mxu0 0.0
    %64 = vmatpush1.msra.mxu0 0.0
    %65 = vmatprep.subr.mxu0 0.0
    %66 = vmatpush1.msra.mxu0 0.0
    %67 = vmatprep.subr.mxu0 0.0
    %68 = vmatpush1.msra.mxu0 0.0
    %69 = vmatprep.subr.mxu0 0.0
    %70 = vmatpush1.msra.mxu0 0.0
    %71 = vmatprep.subr.mxu0 0.0
    %72 = vmatpush1.msra.mxu0 0.0
    %73 = vmatprep.subr.mxu0 0.0
    %74 = vmatpush1.msra.mxu0 0.0
    %75 = vmatprep.subr.mxu0 0.0
    %76 = vmatpush1.msra.mxu0 0.0
    %77 = vmatprep.subr.mxu0 0.0
    %78 = vmatpush1.msra.mxu0 0.0
    %79 = vmatprep.subr.mxu0 0.0
    %80 = vmatpush1.msra.mxu0 0.0
    %81 = vmatprep.subr.mxu0 0.0
    %82 = vmatpush1.msra.mxu0 0.0
    %83 = vmatprep.subr.mxu0 0.0
    %84 = vmatpush1.msra.mxu0 0.0
    %85 = vmatprep.subr.mxu0 0.0
    %86 = vmatpush1.msra.mxu0 0.0
    %87 = vmatprep.subr.mxu0 0.0
    %88 = vmatpush1.msra.mxu0 0.0
    %89 = vmatprep.subr.mxu0 0.0
    %90 = vmatpush1.msra.mxu0 0.0
    %91 = vmatprep.subr.mxu0 0.0
    %92 = vmatpush1.msra.mxu0 0.0
    %93 = vmatprep.subr.mxu0 0.0
    %94 = vmatpush1.msra.mxu0 0.0
    %95 = vmatprep.subr.mxu0 0.0
    %96 = vmatpush1.msra.mxu0 0.0
    %97 = vmatprep.subr.mxu0 0.0
    %98 = vmatpush1.msra.mxu0 0.0
    %99 = vmatprep.subr.mxu0 0.0
    %100 = vmatpush1.msra.mxu0 0.0
    %101 = vmatprep.subr.mxu0 0.0
    %102 = vmatpush1.msra.mxu0 0.0
    %103 = vmatprep.subr.mxu0 0.0
    %104 = vmatpush1.msra.mxu0 0.0
    %105 = vmatprep.mubr.f32.mxu0 0.0
    %106 = vmatmul.mubr.f32.gmra.mrb[0].mxu0 %v39
    %v107 = vpop.f32.mrb[0].mxu0
    %v108 = vadd.f32 %v35, %v107
    %v109 = vpop.f32.mrb[0].mxu0
    %110 = vdwg.mxu0
    %v111 = vmax.f32 %v108, 0.0
    %v112 = vld [vmem:[%s3] sm:$0xff]
    %v113 = vld [vmem:[%s3 + $0x8] sm:$0xff]
    %v114 = vld [vmem:[%s3 + $0x10] sm:$0xff]
    %v115 = vld [vmem:[%s3 + $0x18] sm:$0xff]
    %v116 = vld [vmem:[%s3 + $0x20] sm:$0xff]
    %v117 = vld [vmem:[%s3 + $0x28] sm:$0xff]
    %v118 = vld [vmem:[%s3 + $0x30] sm:$0xff]
    %v119 = vld [vmem:[%s3 + $0x38] sm:$0xff]
    %v120 = vld [vmem:[%s3 + $0x40] sm:$0xff]
    %v121 = vld [vmem:[%s3 + $0x48] sm:$0xff]
    %v122 = vld [vmem:[%s3 + $0x50] sm:$0xff]
    %v123 = vld [vmem:[%s3 + $0x58] sm:$0xff]
    %v124 = vld [vmem:[%s3 + $0x60] sm:$0xff]
    %v125 = vld [vmem:[%s3 + $0x68] sm:$0xff]
    %v126 = vld [vmem:[%s3 + $0x70] sm:$0xff]
    %v127 = vld [vmem:[%s3 + $0x78] sm:$0xff]
    %v128 = vld [vmem:[%s4] sm:$0x1]
    %v130 = vlaneseq
    %v131 = vshrl.u32 %v130, 7
    %v132 = vsub.s32 0, %v131
    %v133 = vrot.slane %v128, %v132
    %135 = vmatprep.subr.mxu0 0.0
    %136 = vmatpush1.msra.mxu0 %v112
    %137 = vmatprep.subr.mxu0 0.0
    %138 = vmatpush1.msra.mxu0 %v113
    %139 = vmatprep.subr.mxu0 0.0
    %140 = vmatpush1.msra.mxu0 %v114
    %141 = vmatprep.subr.mxu0 0.0
    %142 = vmatpush1.msra.mxu0 %v115
    %143 = vmatprep.subr.mxu0 0.0
    %144 = vmatpush1.msra.mxu0 %v116
    %145 = vmatprep.subr.mxu0 0.0
    %146 = vmatpush1.msra.mxu0 %v117
    %147 = vmatprep.subr.mxu0 0.0
    %148 = vmatpush1.msra.mxu0 %v118
    %149 = vmatprep.subr.mxu0 0.0
    %150 = vmatpush1.msra.mxu0 %v119
    %151 = vmatprep.subr.mxu0 0.0
    %152 = vmatpush1.msra.mxu0 %v120
    %153 = vmatprep.subr.mxu0 0.0
    %154 = vmatpush1.msra.mxu0 %v121
    %155 = vmatprep.subr.mxu0 0.0
    %156 = vmatpush1.msra.mxu0 %v122
    %157 = vmatprep.subr.mxu0 0.0
    %158 = vmatpush1.msra.mxu0 %v123
    %159 = vmatprep.subr.mxu0 0.0
    %160 = vmatpush1.msra.mxu0 %v124
    %161 = vmatprep.subr.mxu0 0.0
    %162 = vmatpush1.msra.mxu0 %v125
    %163 = vmatprep.subr.mxu0 0.0
    %164 = vmatpush1.msra.mxu0 %v126
    %165 = vmatprep.subr.mxu0 0.0
    %166 = vmatpush1.msra.mxu0 %v127
    %167 = vmatprep.subr.mxu0 0.0
    %168 = vmatpush1.msra.mxu0 0.0
    %169 = vmatprep.subr.mxu0 0.0
    %170 = vmatpush1.msra.mxu0 0.0
    %171 = vmatprep.subr.mxu0 0.0
    %172 = vmatpush1.msra.mxu0 0.0
    %173 = vmatprep.subr.mxu0 0.0
    %174 = vmatpush1.msra.mxu0 0.0
    %175 = vmatprep.subr.mxu0 0.0
    %176 = vmatpush1.msra.mxu0 0.0
    %177 = vmatprep.subr.mxu0 0.0
    %178 = vmatpush1.msra.mxu0 0.0
    %179 = vmatprep.subr.mxu0 0.0
    %180 = vmatpush1.msra.mxu0 0.0
    %181 = vmatprep.subr.mxu0 0.0
    %182 = vmatpush1.msra.mxu0 0.0
    %183 = vmatprep.subr.mxu0 0.0
    %184 = vmatpush1.msra.mxu0 0.0
    %185 = vmatprep.subr.mxu0 0.0
    %186 = vmatpush1.msra.mxu0 0.0
    %187 = vmatprep.subr.mxu0 0.0
    %188 = vmatpush1.msra.mxu0 0.0
    %189 = vmatprep.subr.mxu0 0.0
    %190 = vmatpush1.msra.mxu0 0.0
    %191 = vmatprep.subr.mxu0 0.0
    %192 = vmatpush1.msra.mxu0 0.0
    %193 = vmatprep.subr.mxu0 0.0
    %194 = vmatpush1.msra.mxu0 0.0
    %195 = vmatprep.subr.mxu0 0.0
    %196 = vmatpush1.msra.mxu0 0.0
    %197 = vmatprep.subr.mxu0 0.0
    %198 = vmatpush1.msra.mxu0 0.0
    %199 = vmatprep.mubr.f32.mxu0 0.0
    %200 = vmatmul.mubr.f32.gmra.mrb[0].mxu0 %v111
    %v201 = vpop.f32.mrb[0].mxu0
    %v202 = vadd.f32 %v133, %v201
    %v203 = vpop.f32.mrb[0].mxu0
    %204 = vdwg.mxu0
    %v205 = vmax.f32 %v202, 0.0
    %v206 = vld [vmem:[%s5] sm:$0xff]
    %v207 = vld [vmem:[%s5 + $0x8] sm:$0xff]
    %v208 = vld [vmem:[%s5 + $0x10] sm:$0xff]
    %v209 = vld [vmem:[%s5 + $0x18] sm:$0xff]
    %v210 = vld [vmem:[%s5 + $0x20] sm:$0xff]
    %v211 = vld [vmem:[%s5 + $0x28] sm:$0xff]
    %v212 = vld [vmem:[%s5 + $0x30] sm:$0xff]
    %v213 = vld [vmem:[%s5 + $0x38] sm:$0xff]
    %v214 = vld [vmem:[%s5 + $0x40] sm:$0xff]
    %v215 = vld [vmem:[%s5 + $0x48] sm:$0xff]
    %v216 = vld [vmem:[%s5 + $0x50] sm:$0xff]
    %v217 = vld [vmem:[%s5 + $0x58] sm:$0xff]
    %v218 = vld [vmem:[%s5 + $0x60] sm:$0xff]
    %v219 = vld [vmem:[%s5 + $0x68] sm:$0xff]
    %v220 = vld [vmem:[%s5 + $0x70] sm:$0xff]
    %v221 = vld [vmem:[%s5 + $0x78] sm:$0xff]
    %v222 = vld [vmem:[%s6] sm:$0x1]
    %v224 = vlaneseq
    %v225 = vshrl.u32 %v224, 7
    %v226 = vsub.s32 0, %v225
    %v227 = vrot.slane %v222, %v226
    %229 = vmatprep.subr.mxu0 0.0
    %230 = vmatpush1.msra.mxu0 %v206
    %231 = vmatprep.subr.mxu0 0.0
    %232 = vmatpush1.msra.mxu0 %v207
    %233 = vmatprep.subr.mxu0 0.0
    %234 = vmatpush1.msra.mxu0 %v208
    %235 = vmatprep.subr.mxu0 0.0
    %236 = vmatpush1.msra.mxu0 %v209
    %237 = vmatprep.subr.mxu0 0.0
    %238 = vmatpush1.msra.mxu0 %v210
    %239 = vmatprep.subr.mxu0 0.0
    %240 = vmatpush1.msra.mxu0 %v211
    %241 = vmatprep.subr.mxu0 0.0
    %242 = vmatpush1.msra.mxu0 %v212
    %243 = vmatprep.subr.mxu0 0.0
    %244 = vmatpush1.msra.mxu0 %v213
    %245 = vmatprep.subr.mxu0 0.0
    %246 = vmatpush1.msra.mxu0 %v214
    %247 = vmatprep.subr.mxu0 0.0
    %248 = vmatpush1.msra.mxu0 %v215
    %249 = vmatprep.subr.mxu0 0.0
    %250 = vmatpush1.msra.mxu0 %v216
    %251 = vmatprep.subr.mxu0 0.0
    %252 = vmatpush1.msra.mxu0 %v217
    %253 = vmatprep.subr.mxu0 0.0
    %254 = vmatpush1.msra.mxu0 %v218
    %255 = vmatprep.subr.mxu0 0.0
    %256 = vmatpush1.msra.mxu0 %v219
    %257 = vmatprep.subr.mxu0 0.0
    %258 = vmatpush1.msra.mxu0 %v220
    %259 = vmatprep.subr.mxu0 0.0
    %260 = vmatpush1.msra.mxu0 %v221
    %261 = vmatprep.subr.mxu0 0.0
    %262 = vmatpush1.msra.mxu0 0.0
    %263 = vmatprep.subr.mxu0 0.0
    %264 = vmatpush1.msra.mxu0 0.0
    %265 = vmatprep.subr.mxu0 0.0
    %266 = vmatpush1.msra.mxu0 0.0
    %267 = vmatprep.subr.mxu0 0.0
    %268 = vmatpush1.msra.mxu0 0.0
    %269 = vmatprep.subr.mxu0 0.0
    %270 = vmatpush1.msra.mxu0 0.0
    %271 = vmatprep.subr.mxu0 0.0
    %272 = vmatpush1.msra.mxu0 0.0
    %273 = vmatprep.subr.mxu0 0.0
    %274 = vmatpush1.msra.mxu0 0.0
    %275 = vmatprep.subr.mxu0 0.0
    %276 = vmatpush1.msra.mxu0 0.0
    %277 = vmatprep.subr.mxu0 0.0
    %278 = vmatpush1.msra.mxu0 0.0
    %279 = vmatprep.subr.mxu0 0.0
    %280 = vmatpush1.msra.mxu0 0.0
    %281 = vmatprep.subr.mxu0 0.0
    %282 = vmatpush1.msra.mxu0 0.0
    %283 = vmatprep.subr.mxu0 0.0
    %284 = vmatpush1.msra.mxu0 0.0
    %285 = vmatprep.subr.mxu0 0.0
    %286 = vmatpush1.msra.mxu0 0.0
    %287 = vmatprep.subr.mxu0 0.0
    %288 = vmatpush1.msra.mxu0 0.0
    %289 = vmatprep.subr.mxu0 0.0
    %290 = vmatpush1.msra.mxu0 0.0
    %291 = vmatprep.subr.mxu0 0.0
    %292 = vmatpush1.msra.mxu0 0.0
    %293 = vmatprep.mubr.f32.mxu0 0.0
    %294 = vmatmul.mubr.f32.gmra.mrb[0].mxu0 %v205
    %v295 = vpop.f32.mrb[0].mxu0
    %v296 = vadd.f32 %v227, %v295
    %v297 = vpop.f32.mrb[0].mxu0
    %298 = vdwg.mxu0
    %v299 = vlaneseq
    %v300 = vand.u32 %v299, 127
    %vm301 = vcmp.lt.s32.totalorder %v300, 4
    %303 = vset.pattern.permute.xlu0 4
    %304 = vperm.xlu0 %303, %v296
    %v305 = vpop.permute.xlu0 %304
    %v307 = vadd.f32 %v296, %v305
    %v308 = vsel %vm301, %v307, 0.0
    %309 = vst.msk [vmem:[#allocation2] sm:$0xff] %vm37, %v308
    %v310 = vlaneseq
    %v311 = vshrl.u32 %v310, 7
    %s312 = smul.u32 0, 8
    %v313 = vstv %s312
    %v314 = vadd.s32 %v311, %v313
    %vm315 = vcmp.lt.s32.totalorder %v314, 2
    %vm316 = vmand %vm301, %vm315
    %v317 = vsel %vm316, %v296, 0.0
    %v318 = vsel %vm37, %v317, 0.0
    %v319 = vrot.slane %v318, 4
    %v320 = vadd.f32 %v318, %v319
    %v321 = vrot.slane %v320, 2
    %v322 = vadd.f32 %v320, %v321
    %v323 = vrot.slane %v322, 1
    %v324 = vadd.f32 %v322, %v323
    %vm325 = vcmask 57344
    %326 = vst.msk [vmem:[%s8] sm:$0x1] %vm325, %v324
    // Predicated region
    $region30: #{net_forward.1} parent=1 // pred_check
      _
    $region31: #{net_forward.1} parent=1 // pred_check_branch
      %328 = sbr.rel (0) target = $region33
    $region32: #{net_forward.1} parent=1 // pred_region
      // Predicated region
      $region34: #{net_forward.1} parent=32 // pred_check
        _
      $region35: #{net_forward.1} parent=32 // pred_check_branch
        %330 = sbr.rel (0) target = $region37
      $region36: #{net_forward.1} parent=32 // pred_region
        // Predicated region
        $region38: #{net_forward.1} parent=36 // pred_check
          _
        $region39: #{net_forward.1} parent=36 // pred_check_branch
          %332 = sbr.rel target = $region41
        $region40: #{net_forward.1} parent=36 // pred_region
          // Predicated region
          $region53: #{net_forward.1} parent=40 // pred_check
            _
          $region54: #{net_forward.1} parent=40 // pred_check_branch
            %347 = sbr.rel (0) target = $region56
          $region55: #{net_forward.1} parent=40 // pred_region
            loop: start=0, step=1, limit=1
            $region57: #{net_forward.1} parent=55 // loop_pre_header
              _
            $region58: #{net_forward.1} parent=55 // loop_header
              %s350 = sphi 0, %s354
              %p351 = scmp.ge.s32.totalorder %s350, 1
              %s355 = sphi [#allocation2], [#allocation2]
              %s356 = sphi %s7, %s7
            $region59: #{net_forward.1} parent=55 // loop_header_branch
              %353 = sbr.rel (%p351) target = $region63
            $region60: #{net_forward.1} parent=55 // loop_body
              %v357 = vld [vmem:[%s355] sm:$0x3]
              %358 = vst [vmem:[%s356] sm:$0x3] %v357
            $region61: #{net_forward.1} parent=55 // loop_footer
              %s354 = sadd.s32 1, %s350
            $region62: #{net_forward.1} parent=55 // loop_footer_branch
              %349 = sbr.rel target = $region58
            $region63: #{net_forward.1} parent=55 // loop_exit
              _
          $region56: #{net_forward.1} parent=40 // pred_fallthru
            _
        $region41: #{net_forward.1} parent=36 // pred_fallthru
          _
        // Predicated region
        $region42: #{net_forward.1} parent=36 // pred_check
          _
        $region43: #{net_forward.1} parent=36 // pred_check_branch
          %334 = sbr.rel (0) target = $region45
        $region44: #{net_forward.1} parent=36 // pred_region
          loop: start=0, step=1, limit=1
          $region46: #{net_forward.1} parent=44 // loop_pre_header
            _
          $region47: #{net_forward.1} parent=44 // loop_header
            %s337 = sphi 0, %s341
            %p338 = scmp.ge.s32.totalorder %s337, 1
            %s342 = sphi [#allocation2], [#allocation2]
            %s343 = sphi %s7, %s7
          $region48: #{net_forward.1} parent=44 // loop_header_branch
            %340 = sbr.rel (%p338) target = $region52
          $region49: #{net_forward.1} parent=44 // loop_body
            %v344 = vld [vmem:[%s342] sm:$0x3]
            %345 = vst [vmem:[%s343] sm:$0x3] %v344
          $region50: #{net_forward.1} parent=44 // loop_footer
            %s341 = sadd.s32 1, %s337
          $region51: #{net_forward.1} parent=44 // loop_footer_branch
            %336 = sbr.rel target = $region47
          $region52: #{net_forward.1} parent=44 // loop_exit
            _
        $region45: #{net_forward.1} parent=36 // pred_fallthru
          _
      $region37: #{net_forward.1} parent=32 // pred_fallthru
        _
      %359 = vnop
    $region33: #{net_forward.1} parent=1 // pred_fallthru
      _
    // Predicated region
    $region64: #{net_forward.1} parent=1 // pred_check
      _
    $region65: #{net_forward.1} parent=1 // pred_check_branch
      %361 = sbr.rel (0) target = $region67
    $region66: #{net_forward.1} parent=1 // pred_region
      _
    $region67: #{net_forward.1} parent=1 // pred_fallthru
      _
    // Predicated region
    $region68: #{net_forward.1} parent=1 // pred_check
      _
    $region69: #{net_forward.1} parent=1 // pred_check_branch
      %363 = sbr.rel (0) target = $region71
    $region70: #{net_forward.1} parent=1 // pred_region
      _
    $region71: #{net_forward.1} parent=1 // pred_fallthru
      _
    // Predicated region
    $region72: #{net_forward.1} parent=1 // pred_check
      _
    $region73: #{net_forward.1} parent=1 // pred_check_branch
      %365 = sbr.rel (0) target = $region75
    $region74: #{net_forward.1} parent=1 // pred_region
      _
    $region75: #{net_forward.1} parent=1 // pred_fallthru
      _

</llo_original>
